<compile_context>
chip_gen: v7x
topology: tpu7x:2x2x1
jax: 0.10.0
libtpu: 0.0.40
codegen_flags: <defaults>
</compile_context>

<pallas_src>
import jax
import jax.numpy as jnp
from jax.experimental import pallas as pl
from jax.experimental.pallas import tpu as pltpu


# ---------------------------------------------------------------------------
# Kernels
# ---------------------------------------------------------------------------

def _ffn_kernel_lane_dense(x_ref, w1_ref, b1_ref, w2_ref, b2_ref, g_ref, beta_ref,
                           segmean_ref, o_ref):
    """Lane-dense path: one slab row = k = 128/d_in original rows, block-diag weights."""
    x = x_ref[...]                                                     # [T, 128] native dtype

    # w_1 + ReLU (MXU in native dtype, f32 accumulation)
    h = jnp.dot(x, w1_ref[...], preferred_element_type=jnp.float32)   # [T, k*d_hid]
    h = jnp.maximum(h + b1_ref[...].astype(jnp.float32), 0.0)

    # w_2 + residual (residual cast delayed to point of use)
    h = h.astype(w2_ref.dtype)
    y = jnp.dot(h, w2_ref[...], preferred_element_type=jnp.float32)   # [T, 128]
    y = y + b2_ref[...].astype(jnp.float32) + x.astype(jnp.float32)

    # Per-original-row LayerNorm: segment reductions via a block-diagonal mean matrix on
    # the MXU (each d_in-lane segment of a slab row is one original row).
    s = segmean_ref[...]                                               # [128, 128] f32
    mean = jnp.dot(y, s, preferred_element_type=jnp.float32)
    centered = y - mean
    var = jnp.dot(centered * centered, s, preferred_element_type=jnp.float32)
    out = centered * jax.lax.rsqrt(var + 1e-6)
    out = out * g_ref[...].astype(jnp.float32) + beta_ref[...].astype(jnp.float32)

    o_ref[...] = out.astype(o_ref.dtype)


def _ffn_kernel_rows(x_ref, w1t_ref, b1_ref, w2t_ref, b2_ref, g_ref, beta_ref, o_ref):
    """Direct path: rows of [tile, d_in] (masked lanes when d_in % 128 != 0)."""
    x = x_ref[...]                                                     # [T, d_in]

    h = jnp.dot(x, w1t_ref[...], preferred_element_type=jnp.float32)  # [T, d_hid]
    h = jnp.maximum(h + b1_ref[...].astype(jnp.float32), 0.0)

    h = h.astype(w2t_ref.dtype)
    y = jnp.dot(h, w2t_ref[...], preferred_element_type=jnp.float32)  # [T, d_in]
    y = y + b2_ref[...].astype(jnp.float32) + x.astype(jnp.float32)

    mean = jnp.mean(y, axis=-1, keepdims=True)
    centered = y - mean
    var = jnp.mean(centered * centered, axis=-1, keepdims=True)
    out = centered * jax.lax.rsqrt(var + 1e-6)
    out = out * g_ref[...].astype(jnp.float32) + beta_ref[...].astype(jnp.float32)

    o_ref[...] = out.astype(o_ref.dtype)


# ---------------------------------------------------------------------------
# Sizing helpers
# ---------------------------------------------------------------------------

def _cdiv(a, b):
    return -(-a // b)


def _tpu_info():
    """Best-effort (physical VMEM bytes per TensorCore, is-multi-TensorCore-chip)."""
    kind = ""
    try:
        kind = jax.devices()[0].device_kind.lower()
    except Exception:
        pass
    vmem = None
    try:
        vmem = int(pltpu.get_tpu_info().vmem_capacity_bytes)
    except Exception:
        vmem = None
    if vmem is None or vmem <= 0:
        # v5e/v6e (and v5p) have 128 MiB per core; otherwise assume the conservative 64 MiB.
        vmem = 128 * 1024 * 1024 if ("v5" in kind or "v6" in kind) else 64 * 1024 * 1024
    multi_tc = any(tag in kind for tag in ("v4", "v5p", "v7", "7x"))
    return vmem, multi_tc


def _pick_tile(total_rows, per_row_bytes, resident_bytes, vmem_budget, pack, multi_tc,
               cap=2048):
    """Largest row tile that fits the VMEM budget, rounded to the sublane packing."""
    avail = max(vmem_budget - resident_bytes, pack * per_row_bytes)
    tile = min(avail // per_row_bytes, cap)
    if multi_tc and total_rows > pack:
        # Keep >= ~4 grid steps so the ("parallel",) axis can shard across TensorCores.
        tile = min(tile, _cdiv(_cdiv(total_rows, 4), pack) * pack)
    tile = max((tile // pack) * pack, pack)
    if tile >= total_rows:
        return int(total_rows)       # one full block (block dim == array dim is allowed)
    return int(tile)


# ---------------------------------------------------------------------------
# Wrappers (two layouts)
# ---------------------------------------------------------------------------

def _ffn_lane_dense(x2d, w1, b1, w2, b2, gamma, beta, pack, vmem_budget, vmem_limit,
                    multi_tc, tile_rows):
    n, d_in = x2d.shape
    d_hid = w1.shape[0]
    k = 128 // d_in
    rows = n // k
    dt = x2d.dtype
    wdt = w1.dtype
    itemsize = jnp.dtype(dt).itemsize
    w_itemsize = jnp.dtype(wdt).itemsize

    # One-time parameter relayout (tiny tensors).  Block-diagonal weights let one lane-dense
    # slab row carry k original rows straight through the MXU; biases/affine params are tiled.
    eye_k = jnp.eye(k, dtype=wdt)
    w1big = jnp.kron(eye_k, jnp.transpose(w1))               # [128, k*d_hid]
    w2big = jnp.kron(eye_k, jnp.transpose(w2))               # [k*d_hid, 128]
    b1big = jnp.tile(b1, k).reshape(1, k * d_hid)
    b2big = jnp.tile(b2, k).reshape(1, 128)
    g_big = jnp.tile(gamma, k).reshape(1, 128)
    beta_big = jnp.tile(beta, k).reshape(1, 128)
    seg = jnp.arange(128) // d_in
    segmean = (seg[:, None] == seg[None, :]).astype(jnp.float32) / float(d_in)  # [128,128]

    x_slab = x2d.reshape(rows, 128)                           # free row-major reshape

    # VMEM budget: double-buffered x/out slabs + resident params (assumed double-buffered)
    # + in-body f32/bf16 temporaries (h + a handful of [T,128] f32 values).
    per_row = 4 * 128 * itemsize + k * d_hid * (4 + w_itemsize) + 8 * 128 * 4
    resident = 2 * (2 * 128 * k * d_hid * w_itemsize + 128 * 128 * 4
                    + (k * d_hid + 3 * 128) * max(w_itemsize, 4))
    if tile_rows is None:
        tile_rows = _pick_tile(rows, per_row, resident, vmem_budget, pack, multi_tc)
    grid = (_cdiv(rows, tile_rows),)

    out_slab = pl.pallas_call(
        _ffn_kernel_lane_dense,
        out_shape=jax.ShapeDtypeStruct((rows, 128), dt),
        grid_spec=pltpu.PrefetchScalarGridSpec(
            num_scalar_prefetch=0,
            grid=grid,
            in_specs=[
                pl.BlockSpec((tile_rows, 128), lambda i: (i, 0)),     # x slab: streamed
                pl.BlockSpec((128, k * d_hid), lambda i: (0, 0)),     # W1 block-diag: resident
                pl.BlockSpec((1, k * d_hid), lambda i: (0, 0)),       # b1
                pl.BlockSpec((k * d_hid, 128), lambda i: (0, 0)),     # W2 block-diag
                pl.BlockSpec((1, 128), lambda i: (0, 0)),             # b2
                pl.BlockSpec((1, 128), lambda i: (0, 0)),             # gamma
                pl.BlockSpec((1, 128), lambda i: (0, 0)),             # beta
                pl.BlockSpec((128, 128), lambda i: (0, 0)),           # segment-mean matrix
            ],
            out_specs=pl.BlockSpec((tile_rows, 128), lambda i: (i, 0)),
        ),
        compiler_params=pltpu.CompilerParams(
            dimension_semantics=("parallel",),
            vmem_limit_bytes=vmem_limit,
        ),
        cost_estimate=pl.CostEstimate(
            flops=2 * rows * 128 * (2 * k * d_hid + 2 * 128),
            transcendentals=0,
            bytes_accessed=2 * rows * 128 * itemsize + resident // 2,
        ),
    )(x_slab, w1big, b1big, w2big, b2big, g_big, beta_big, segmean)

    return out_slab.reshape(n, d_in)


def _ffn_direct(x2d, w1, b1, w2, b2, gamma, beta, pack, vmem_budget, vmem_limit,
                multi_tc, tile_rows):
    n, d_in = x2d.shape
    d_hid = w1.shape[0]
    dt = x2d.dtype
    wdt = w1.dtype
    itemsize = jnp.dtype(dt).itemsize
    w_itemsize = jnp.dtype(wdt).itemsize

    w1t = jnp.transpose(w1)                    # [d_in, d_hid]
    w2t = jnp.transpose(w2)                    # [d_hid, d_in]
    b1_2d = b1.reshape(1, d_hid)
    b2_2d = b2.reshape(1, d_in)
    g_2d = gamma.reshape(1, d_in)
    beta_2d = beta.reshape(1, d_in)

    per_row = 4 * d_in * itemsize + d_hid * (4 + w_itemsize) + 8 * d_in * 4
    resident = 2 * (2 * d_in * d_hid * w_itemsize + (d_hid + 3 * d_in) * max(w_itemsize, 4))
    if tile_rows is None:
        tile_rows = _pick_tile(n, per_row, resident, vmem_budget, pack, multi_tc)
    grid = (_cdiv(n, tile_rows),)

    out2d = pl.pallas_call(
        _ffn_kernel_rows,
        out_shape=jax.ShapeDtypeStruct((n, d_in), dt),
        grid_spec=pltpu.PrefetchScalarGridSpec(
            num_scalar_prefetch=0,
            grid=grid,
            in_specs=[
                pl.BlockSpec((tile_rows, d_in), lambda i: (i, 0)),    # x: streamed
                pl.BlockSpec((d_in, d_hid), lambda i: (0, 0)),        # W1^T: resident
                pl.BlockSpec((1, d_hid), lambda i: (0, 0)),           # b1
                pl.BlockSpec((d_hid, d_in), lambda i: (0, 0)),        # W2^T
                pl.BlockSpec((1, d_in), lambda i: (0, 0)),            # b2
                pl.BlockSpec((1, d_in), lambda i: (0, 0)),            # gamma
                pl.BlockSpec((1, d_in), lambda i: (0, 0)),            # beta
            ],
            out_specs=pl.BlockSpec((tile_rows, d_in), lambda i: (i, 0)),
        ),
        compiler_params=pltpu.CompilerParams(
            dimension_semantics=("parallel",),
            vmem_limit_bytes=vmem_limit,
        ),
        cost_estimate=pl.CostEstimate(
            flops=4 * n * d_in * d_hid,
            transcendentals=0,
            bytes_accessed=2 * n * d_in * itemsize + resident // 2,
        ),
    )(x2d, w1t, b1_2d, w2t, b2_2d, g_2d, beta_2d)

    return out2d


def positionwise_ffn(x, w1, b1, w2, b2, gamma, beta, *, tile_rows=None):
    """x: [batch, seq, d_in] -> [batch, seq, d_in].

    w1: [d_hid, d_in], b1: [d_hid], w2: [d_in, d_hid], b2/gamma/beta: [d_in]
    (PyTorch nn.Linear / nn.LayerNorm parameter conventions).
    """
    batch, seq, d_in = x.shape
    n = batch * seq
    x2d = x.reshape(n, d_in)

    pack = max(1, 32 // jnp.dtype(x.dtype).itemsize)   # sublane packing: 8 f32 / 16 bf16 / 32 int8
    vmem_phys, multi_tc = _tpu_info()
    vmem_budget = int(vmem_phys * 0.55)                # tile-sizing budget
    vmem_limit = int(vmem_phys * 0.75)                 # scoped-VMEM limit handed to Mosaic

    # Lane-dense slab layout whenever the (free) wrapper reshape is exact.
    lane_dense_ok = (d_in % 128 != 0) and (128 % d_in == 0) and (n % (128 // d_in) == 0)
    if lane_dense_ok:
        out2d = _ffn_lane_dense(x2d, w1, b1, w2, b2, gamma, beta, pack,
                                vmem_budget, vmem_limit, multi_tc, tile_rows)
    else:
        # Fallback: masked-lane loads/stores when d_in is not a multiple of 128.
        out2d = _ffn_direct(x2d, w1, b1, w2, b2, gamma, beta, pack,
                            vmem_budget, vmem_limit, multi_tc, tile_rows)
    return out2d.reshape(batch, seq, d_in)


# ---------------------------------------------------------------------------
# Reference + self-test
# ---------------------------------------------------------------------------

def _reference(x, w1, b1, w2, b2, gamma, beta):
    h = jnp.maximum(x @ w1.T + b1, 0.0)
    y = h @ w2.T + b2 + x
    mean = jnp.mean(y, axis=-1, keepdims=True)
    var = jnp.mean((y - mean) ** 2, axis=-1, keepdims=True)
    return (y - mean) / jnp.sqrt(var + 1e-6) * gamma + beta


def _make_case(key, batch, seq, d_in, d_hid):
    kx, kw1, kb1, kw2, kb2, kg, kb = jax.random.split(key, 7)
    lim1 = 1.0 / (d_in ** 0.5)
    lim2 = 1.0 / (d_hid ** 0.5)
    x = jax.random.normal(kx, (batch, seq, d_in), jnp.float32)
    w1 = jax.random.uniform(kw1, (d_hid, d_in), jnp.float32, -lim1, lim1)
    b1 = jax.random.uniform(kb1, (d_hid,), jnp.float32, -lim1, lim1)
    w2 = jax.random.uniform(kw2, (d_in, d_hid), jnp.float32, -lim2, lim2)
    b2 = jax.random.uniform(kb2, (d_in,), jnp.float32, -lim2, lim2)
    gamma = 1.0 + 0.1 * jax.random.normal(kg, (d_in,), jnp.float32)
    beta = 0.1 * jax.random.normal(kb, (d_in,), jnp.float32)
    return x, w1, b1, w2, b2, gamma, beta


if __name__ == "__main__":
    key = jax.random.PRNGKey(0)
    k1, k2, k3 = jax.random.split(key, 3)

    cases = [
        # Lane-dense slab path, single full block.
        dict(args=_make_case(k1, batch=2, seq=8, d_in=32, d_hid=64), tile=None),
        # Lane-dense slab path with a ragged last block (grid = cdiv(10, 8) = 2).
        dict(args=_make_case(k2, batch=5, seq=8, d_in=32, d_hid=64), tile=8),
        # Direct fallback path (d_in does not divide 128) with a ragged grid.
        dict(args=_make_case(k3, batch=2, seq=10, d_in=48, d_hid=96), tile=8),
    ]

    for idx, case in enumerate(cases):
        x, w1, b1, w2, b2, gamma, beta = case["args"]
        out = positionwise_ffn(x, w1, b1, w2, b2, gamma, beta, tile_rows=case["tile"])
        out = jax.block_until_ready(out)
        ref = _reference(x, w1, b1, w2, b2, gamma, beta)
        assert out.shape == x.shape, f"case {idx}: bad shape {out.shape}"
        assert jnp.allclose(out, ref, atol=1e-4, rtol=1e-4), f"case {idx}: mismatch vs reference"

    print("KERNEL_OK")
</pallas_src>

<mosaic_0001>
module attributes {stable_mosaic.version = 11 : i64} {
  func.func @_ffn_kernel_lane_dense(%arg0: i32, %arg1: memref<4x128xf32, #tpu.memory_space<vmem>>, %arg2: memref<128x256xf32, #tpu.memory_space<vmem>>, %arg3: memref<1x256xf32, #tpu.memory_space<vmem>>, %arg4: memref<256x128xf32, #tpu.memory_space<vmem>>, %arg5: memref<1x128xf32, #tpu.memory_space<vmem>>, %arg6: memref<1x128xf32, #tpu.memory_space<vmem>>, %arg7: memref<1x128xf32, #tpu.memory_space<vmem>>, %arg8: memref<128x128xf32, #tpu.memory_space<vmem>>, %arg9: memref<4x128xf32, #tpu.memory_space<vmem>>) attributes {dimension_semantics = [#tpu.dimension_semantics<parallel>], iteration_bounds = array<i64: 1>, scalar_prefetch = 0 : i64, scratch_operands = 0 : i64, tpu.core_type = #tpu.core_type<tc>, window_params = [{transform_indices = @transform_0, window_bounds = array<i64: 4, 128>}, {pipeline_mode = #tpu.pipeline_mode<synchronous>, transform_indices = @transform_1, window_bounds = array<i64: 128, 256>}, {pipeline_mode = #tpu.pipeline_mode<synchronous>, transform_indices = @transform_2, window_bounds = array<i64: 1, 256>}, {pipeline_mode = #tpu.pipeline_mode<synchronous>, transform_indices = @transform_3, window_bounds = array<i64: 256, 128>}, {pipeline_mode = #tpu.pipeline_mode<synchronous>, transform_indices = @transform_4, window_bounds = array<i64: 1, 128>}, {pipeline_mode = #tpu.pipeline_mode<synchronous>, transform_indices = @transform_5, window_bounds = array<i64: 1, 128>}, {pipeline_mode = #tpu.pipeline_mode<synchronous>, transform_indices = @transform_6, window_bounds = array<i64: 1, 128>}, {pipeline_mode = #tpu.pipeline_mode<synchronous>, transform_indices = @transform_7, window_bounds = array<i64: 128, 128>}, {transform_indices = @transform_8, window_bounds = array<i64: 4, 128>}]} {
    %c0 = arith.constant 0 : index
    %c0_0 = arith.constant 0 : index
    %0 = vector.load %arg1[%c0, %c0_0] : memref<4x128xf32, #tpu.memory_space<vmem>>, vector<4x128xf32>
    %c0_1 = arith.constant 0 : index
    %c0_2 = arith.constant 0 : index
    %1 = vector.load %arg2[%c0_1, %c0_2] : memref<128x256xf32, #tpu.memory_space<vmem>>, vector<128x256xf32>
    %cst = arith.constant dense<0.000000e+00> : vector<4x256xf32>
    %2 = tpu.matmul %0, %1, %cst {dimension_numbers = #tpu.dot_dimension_numbers<[1], [0], [0], [1], [0, 0, 1, 1], [], []>} : vector<4x128xf32>, vector<128x256xf32>, vector<4x256xf32> -> vector<4x256xf32>
    %c0_3 = arith.constant 0 : index
    %c0_4 = arith.constant 0 : index
    %3 = vector.load %arg3[%c0_3, %c0_4] : memref<1x256xf32, #tpu.memory_space<vmem>>, vector<1x256xf32>
    %4 = vector.broadcast %3 : vector<1x256xf32> to vector<4x256xf32>
    %5 = arith.addf %2, %4 : vector<4x256xf32>
    %cst_5 = arith.constant 0.000000e+00 : f32
    %6 = vector.broadcast %cst_5 : f32 to vector<4x256xf32>
    %7 = arith.maximumf %5, %6 : vector<4x256xf32>
    %c0_6 = arith.constant 0 : index
    %c0_7 = arith.constant 0 : index
    %8 = vector.load %arg4[%c0_6, %c0_7] : memref<256x128xf32, #tpu.memory_space<vmem>>, vector<256x128xf32>
    %cst_8 = arith.constant dense<0.000000e+00> : vector<4x128xf32>
    %9 = tpu.matmul %7, %8, %cst_8 {dimension_numbers = #tpu.dot_dimension_numbers<[1], [0], [0], [1], [0, 0, 1, 1], [], []>} : vector<4x256xf32>, vector<256x128xf32>, vector<4x128xf32> -> vector<4x128xf32>
    %c0_9 = arith.constant 0 : index
    %c0_10 = arith.constant 0 : index
    %10 = vector.load %arg5[%c0_9, %c0_10] : memref<1x128xf32, #tpu.memory_space<vmem>>, vector<1x128xf32>
    %11 = vector.broadcast %10 : vector<1x128xf32> to vector<4x128xf32>
    %12 = arith.addf %9, %11 : vector<4x128xf32>
    %13 = arith.addf %12, %0 : vector<4x128xf32>
    %c0_11 = arith.constant 0 : index
    %c0_12 = arith.constant 0 : index
    %14 = vector.load %arg8[%c0_11, %c0_12] : memref<128x128xf32, #tpu.memory_space<vmem>>, vector<128x128xf32>
    %cst_13 = arith.constant dense<0.000000e+00> : vector<4x128xf32>
    %15 = tpu.matmul %13, %14, %cst_13 {dimension_numbers = #tpu.dot_dimension_numbers<[1], [0], [0], [1], [0, 0, 1, 1], [], []>} : vector<4x128xf32>, vector<128x128xf32>, vector<4x128xf32> -> vector<4x128xf32>
    %16 = arith.subf %13, %15 : vector<4x128xf32>
    %17 = arith.mulf %16, %16 : vector<4x128xf32>
    %cst_14 = arith.constant dense<0.000000e+00> : vector<4x128xf32>
    %18 = tpu.matmul %17, %14, %cst_14 {dimension_numbers = #tpu.dot_dimension_numbers<[1], [0], [0], [1], [0, 0, 1, 1], [], []>} : vector<4x128xf32>, vector<128x128xf32>, vector<4x128xf32> -> vector<4x128xf32>
    %cst_15 = arith.constant 9.99999997E-7 : f32
    %19 = vector.broadcast %cst_15 : f32 to vector<4x128xf32>
    %20 = arith.addf %18, %19 : vector<4x128xf32>
    %21 = math.rsqrt %20 : vector<4x128xf32>
    %22 = arith.mulf %16, %21 : vector<4x128xf32>
    %c0_16 = arith.constant 0 : index
    %c0_17 = arith.constant 0 : index
    %23 = vector.load %arg6[%c0_16, %c0_17] : memref<1x128xf32, #tpu.memory_space<vmem>>, vector<1x128xf32>
    %24 = vector.broadcast %23 : vector<1x128xf32> to vector<4x128xf32>
    %25 = arith.mulf %22, %24 : vector<4x128xf32>
    %c0_18 = arith.constant 0 : index
    %c0_19 = arith.constant 0 : index
    %26 = vector.load %arg7[%c0_18, %c0_19] : memref<1x128xf32, #tpu.memory_space<vmem>>, vector<1x128xf32>
    %27 = vector.broadcast %26 : vector<1x128xf32> to vector<4x128xf32>
    %28 = arith.addf %25, %27 : vector<4x128xf32>
    %c0_20 = arith.constant 0 : index
    %c0_21 = arith.constant 0 : index
    %29 = vector.load %arg9[%c0_20, %c0_21] : memref<4x128xf32, #tpu.memory_space<vmem>>, vector<4x128xf32>
    tpu.vector_store %arg9[%c0_20, %c0_21], %28 {strides = array<i32>} : memref<4x128xf32, #tpu.memory_space<vmem>>, vector<4x128xf32>,
    return
  }
  func.func @transform_0(%arg0: i32) -> (i32, i32) {
    %c0_i32 = arith.constant 0 : i32
    %c0_i32_0 = arith.constant 0 : i32
    return %arg0, %c0_i32 : i32, i32
  }
  func.func @transform_1(%arg0: i32) -> (i32, i32) {
    %c0_i32 = arith.constant 0 : i32
    %c0_i32_0 = arith.constant 0 : i32
    %c0_i32_1 = arith.constant 0 : i32
    return %c0_i32, %c0_i32_0 : i32, i32
  }
  func.func @transform_2(%arg0: i32) -> (i32, i32) {
    %c0_i32 = arith.constant 0 : i32
    %c0_i32_0 = arith.constant 0 : i32
    %c0_i32_1 = arith.constant 0 : i32
    return %c0_i32, %c0_i32_0 : i32, i32
  }
  func.func @transform_3(%arg0: i32) -> (i32, i32) {
    %c0_i32 = arith.constant 0 : i32
    %c0_i32_0 = arith.constant 0 : i32
    %c0_i32_1 = arith.constant 0 : i32
    return %c0_i32, %c0_i32_0 : i32, i32
  }
  func.func @transform_4(%arg0: i32) -> (i32, i32) {
    %c0_i32 = arith.constant 0 : i32
    %c0_i32_0 = arith.constant 0 : i32
    %c0_i32_1 = arith.constant 0 : i32
    return %c0_i32, %c0_i32_0 : i32, i32
  }
  func.func @transform_5(%arg0: i32) -> (i32, i32) {
    %c0_i32 = arith.constant 0 : i32
    %c0_i32_0 = arith.constant 0 : i32
    %c0_i32_1 = arith.constant 0 : i32
    return %c0_i32, %c0_i32_0 : i32, i32
  }
  func.func @transform_6(%arg0: i32) -> (i32, i32) {
    %c0_i32 = arith.constant 0 : i32
    %c0_i32_0 = arith.constant 0 : i32
    %c0_i32_1 = arith.constant 0 : i32
    return %c0_i32, %c0_i32_0 : i32, i32
  }
  func.func @transform_7(%arg0: i32) -> (i32, i32) {
    %c0_i32 = arith.constant 0 : i32
    %c0_i32_0 = arith.constant 0 : i32
    %c0_i32_1 = arith.constant 0 : i32
    return %c0_i32, %c0_i32_0 : i32, i32
  }
  func.func @transform_8(%arg0: i32) -> (i32, i32) {
    %c0_i32 = arith.constant 0 : i32
    %c0_i32_0 = arith.constant 0 : i32
    return %arg0, %c0_i32 : i32, i32
  }
}

</mosaic_0001>

<llo_original>
// kernel: tpu_custom_call.1
$region0: #{tpu_custom_call.1}
  #allocation0 [shape = 'u32[]', space=smem, size = 0x4, offset = 0x4, fixed_abs, tag = 'smem constant byte address 0x4 - core index']
  #allocation1 [shape = 'u32[144,128]{1,0:T(1,128)}', space=vmem, size = 0x12000, scoped, tag = 'internal scratch']
  %s0 = inlined_call_operand.hbm [shape: f32[4,128], index: 0, kind: input, shape index: {}]
  %s1 = inlined_call_operand.hbm [shape: f32[128,256], index: 1, kind: input, shape index: {}]
  %s2 = inlined_call_operand.vmem [shape: f32[1,256], index: 2, kind: input, shape index: {}]
  %s3 = inlined_call_operand.hbm [shape: f32[256,128], index: 3, kind: input, shape index: {}]
  %s4 = inlined_call_operand.vmem [shape: f32[1,128], index: 4, kind: input, shape index: {}]
  %s5 = inlined_call_operand.vmem [shape: f32[1,128], index: 5, kind: input, shape index: {}]
  %s6 = inlined_call_operand.vmem [shape: f32[1,128], index: 6, kind: input, shape index: {}]
  %s7 = inlined_call_operand.hbm [shape: f32[128,128], index: 7, kind: input, shape index: {}]
  %s8 = inlined_call_operand.hbm [shape: f32[4,128], index: 8, kind: output, shape index: {}]
  %s9 = sld [smem:[#allocation0]]
  $region58: #{tpu_custom_call.1} parent=0
    _
  %s11 = ssub.s32 1, %s9
  %s12 = scalar_select 0, %s11, %s9
  $region1: #{tpu_custom_call.1} parent=0
    #allocation2 [shape = 'u8[2048]{0}', space=vmem, size = 0x800, scoped, tag = 'input window, operand 0, single buffered']
    #allocation3 [shape = 's32[1]{0}', space=sflag, size = 0x4, scoped, tag = 'scoped memory for tpu_custom_call.1']
    #allocation4 [shape = 's32[1]{0}', space=sflag, size = 0x4, scoped, tag = 'scoped memory for tpu_custom_call.1']
    #allocation5 [shape = 'u8[131072]{0}', space=vmem, size = 0x20000, scoped, tag = 'input window, operand 1, single buffered']
    #allocation6 [shape = 's32[1]{0}', space=sflag, size = 0x4, scoped, tag = 'scoped memory for tpu_custom_call.1']
    #allocation7 [shape = 'u8[131072]{0}', space=vmem, size = 0x20000, scoped, tag = 'input window, operand 3, single buffered']
    #allocation8 [shape = 'u8[65536]{0}', space=vmem, size = 0x10000, scoped, tag = 'input window, operand 7, single buffered']
    #allocation9 [shape = 's32[1]{0}', space=sflag, size = 0x4, scoped, tag = 'scoped memory for tpu_custom_call.1']
    #allocation10 [shape = 'u8[2048]{0}', space=vmem, size = 0x800, scoped, tag = 'output window, operand 0, single buffered']
    %13 = vsyncpa [#allocation3], 0
    %14 = vsyncpa [#allocation6], 0
    %15 = vsyncpa [#allocation9], 0
    %16 = vsyncpa [#allocation4], 0
    // Predicated region
    $region2: #{tpu_custom_call.1} parent=1 // pred_check
      _
    $region3: #{tpu_custom_call.1} parent=1 // pred_check_branch
      %18 = sbr.rel (0) target = $region5
    $region4: #{tpu_custom_call.1} parent=1 // pred_region
      %s20 = ssub.s32 64, 64
      %21 = vsyncadd [#allocation3], %s20
      %s23 = sshll.u32 [#allocation2], 4
      %s24 = int_to_ptr.vmem [resolvable:$true] %s23
      %26 = dma.hbm_to_vmem [thread:$0]  %s0, 64, %s24, [#allocation3]
    $region5: #{tpu_custom_call.1} parent=1 // pred_fallthru
      _
    // Predicated region
    $region6: #{tpu_custom_call.1} parent=1 // pred_check
      _
    $region7: #{tpu_custom_call.1} parent=1 // pred_check_branch
      %28 = sbr.rel (0) target = $region9
    $region8: #{tpu_custom_call.1} parent=1 // pred_region
      %s30 = ssub.s32 4096, 4096
      %31 = vsyncadd [#allocation6], %s30
      %s32 = sshll.u32 [#allocation5], 4
      %s33 = int_to_ptr.vmem [resolvable:$true] %s32
      %38 = dma.hbm_to_vmem [thread:$0]  %s1, 4096, %s33, [#allocation6], 256, 256, 16
    $region9: #{tpu_custom_call.1} parent=1 // pred_fallthru
      _
    // Predicated region
    $region10: #{tpu_custom_call.1} parent=1 // pred_check
      _
    $region11: #{tpu_custom_call.1} parent=1 // pred_check_branch
      %40 = sbr.rel (0) target = $region13
    $region12: #{tpu_custom_call.1} parent=1 // pred_region
      _
    $region13: #{tpu_custom_call.1} parent=1 // pred_fallthru
      _
    // Predicated region
    $region14: #{tpu_custom_call.1} parent=1 // pred_check
      _
    $region15: #{tpu_custom_call.1} parent=1 // pred_check_branch
      %42 = sbr.rel (0) target = $region17
    $region16: #{tpu_custom_call.1} parent=1 // pred_region
      %s44 = ssub.s32 4096, 4096
      %45 = vsyncadd [#allocation6], %s44
      %s46 = sshll.u32 [#allocation7], 4
      %s47 = int_to_ptr.vmem [resolvable:$true] %s46
      %52 = dma.hbm_to_vmem [thread:$0]  %s3, 4096, %s47, [#allocation6], 128, 128, 8
    $region17: #{tpu_custom_call.1} parent=1 // pred_fallthru
      _
    // Predicated region
    $region18: #{tpu_custom_call.1} parent=1 // pred_check
      _
    $region19: #{tpu_custom_call.1} parent=1 // pred_check_branch
      %54 = sbr.rel (0) target = $region21
    $region20: #{tpu_custom_call.1} parent=1 // pred_region
      _
    $region21: #{tpu_custom_call.1} parent=1 // pred_fallthru
      _
    // Predicated region
    $region22: #{tpu_custom_call.1} parent=1 // pred_check
      _
    $region23: #{tpu_custom_call.1} parent=1 // pred_check_branch
      %56 = sbr.rel (0) target = $region25
    $region24: #{tpu_custom_call.1} parent=1 // pred_region
      _
    $region25: #{tpu_custom_call.1} parent=1 // pred_fallthru
      _
    // Predicated region
    $region26: #{tpu_custom_call.1} parent=1 // pred_check
      _
    $region27: #{tpu_custom_call.1} parent=1 // pred_check_branch
      %58 = sbr.rel (0) target = $region29
    $region28: #{tpu_custom_call.1} parent=1 // pred_region
      _
    $region29: #{tpu_custom_call.1} parent=1 // pred_fallthru
      _
    // Predicated region
    $region30: #{tpu_custom_call.1} parent=1 // pred_check
      _
    $region31: #{tpu_custom_call.1} parent=1 // pred_check_branch
      %60 = sbr.rel (0) target = $region33
    $region32: #{tpu_custom_call.1} parent=1 // pred_region
      %s62 = ssub.s32 2048, 2048
      %63 = vsyncadd [#allocation9], %s62
      %s64 = sshll.u32 [#allocation8], 4
      %s65 = int_to_ptr.vmem [resolvable:$true] %s64
      %70 = dma.hbm_to_vmem [thread:$0]  %s7, 2048, %s65, [#allocation9], 128, 128, 8
    $region33: #{tpu_custom_call.1} parent=1 // pred_fallthru
      _
    // Predicated region
    $region34: #{tpu_custom_call.1} parent=1 // pred_check
      _
    $region35: #{tpu_custom_call.1} parent=1 // pred_check_branch
      %72 = sbr.rel (0) target = $region37
    $region36: #{tpu_custom_call.1} parent=1 // pred_region
      %73 = dma.done [#allocation3], 64
    $region37: #{tpu_custom_call.1} parent=1 // pred_fallthru
      _
    // Predicated region
    $region38: #{tpu_custom_call.1} parent=1 // pred_check
      _
    $region39: #{tpu_custom_call.1} parent=1 // pred_check_branch
      %75 = sbr.rel (0) target = $region41
    $region40: #{tpu_custom_call.1} parent=1 // pred_region
      %76 = dma.done [#allocation6], 4096
    $region41: #{tpu_custom_call.1} parent=1 // pred_fallthru
      _
    // Predicated region
    $region42: #{tpu_custom_call.1} parent=1 // pred_check
      _
    $region43: #{tpu_custom_call.1} parent=1 // pred_check_branch
      %78 = sbr.rel (0) target = $region45
    $region44: #{tpu_custom_call.1} parent=1 // pred_region
      %79 = dma.done [#allocation6], 4096
    $region45: #{tpu_custom_call.1} parent=1 // pred_fallthru
      _
    // Predicated region
    $region46: #{tpu_custom_call.1} parent=1 // pred_check
      _
    $region47: #{tpu_custom_call.1} parent=1 // pred_check_branch
      %81 = sbr.rel (0) target = $region49
    $region48: #{tpu_custom_call.1} parent=1 // pred_region
      %82 = dma.done [#allocation9], 2048
    $region49: #{tpu_custom_call.1} parent=1 // pred_fallthru
      _
    %v83 = vld [vmem:[#allocation2] sm:$0xf]
    %v84 = vld [vmem:[#allocation5] sm:$0xff]
    %v85 = vld [vmem:[#allocation5 + $0x8] sm:$0xff]
    %v86 = vld [vmem:[#allocation5 + $0x10] sm:$0xff]
    %v87 = vld [vmem:[#allocation5 + $0x18] sm:$0xff]
    %v88 = vld [vmem:[#allocation5 + $0x20] sm:$0xff]
    %v89 = vld [vmem:[#allocation5 + $0x28] sm:$0xff]
    %v90 = vld [vmem:[#allocation5 + $0x30] sm:$0xff]
    %v91 = vld [vmem:[#allocation5 + $0x38] sm:$0xff]
    %v92 = vld [vmem:[#allocation5 + $0x40] sm:$0xff]
    %v93 = vld [vmem:[#allocation5 + $0x48] sm:$0xff]
    %v94 = vld [vmem:[#allocation5 + $0x50] sm:$0xff]
    %v95 = vld [vmem:[#allocation5 + $0x58] sm:$0xff]
    %v96 = vld [vmem:[#allocation5 + $0x60] sm:$0xff]
    %v97 = vld [vmem:[#allocation5 + $0x68] sm:$0xff]
    %v98 = vld [vmem:[#allocation5 + $0x70] sm:$0xff]
    %v99 = vld [vmem:[#allocation5 + $0x78] sm:$0xff]
    %v100 = vld [vmem:[#allocation5 + $0x80] sm:$0xff]
    %v101 = vld [vmem:[#allocation5 + $0x88] sm:$0xff]
    %v102 = vld [vmem:[#allocation5 + $0x90] sm:$0xff]
    %v103 = vld [vmem:[#allocation5 + $0x98] sm:$0xff]
    %v104 = vld [vmem:[#allocation5 + $0xa0] sm:$0xff]
    %v105 = vld [vmem:[#allocation5 + $0xa8] sm:$0xff]
    %v106 = vld [vmem:[#allocation5 + $0xb0] sm:$0xff]
    %v107 = vld [vmem:[#allocation5 + $0xb8] sm:$0xff]
    %v108 = vld [vmem:[#allocation5 + $0xc0] sm:$0xff]
    %v109 = vld [vmem:[#allocation5 + $0xc8] sm:$0xff]
    %v110 = vld [vmem:[#allocation5 + $0xd0] sm:$0xff]
    %v111 = vld [vmem:[#allocation5 + $0xd8] sm:$0xff]
    %v112 = vld [vmem:[#allocation5 + $0xe0] sm:$0xff]
    %v113 = vld [vmem:[#allocation5 + $0xe8] sm:$0xff]
    %v114 = vld [vmem:[#allocation5 + $0xf0] sm:$0xff]
    %v115 = vld [vmem:[#allocation5 + $0xf8] sm:$0xff]
    %v116 = vld [vmem:[%s2] sm:$0x3]
    %v118 = vlaneseq
    %v119 = vshrl.u32 %v118, 7
    %v120 = vsub.s32 0, %v119
    %v121 = vrot.slane %v116, %v120
    %v122 = vlaneseq
    %v123 = vshrl.u32 %v122, 7
    %v124 = vsub.s32 1, %v123
    %v125 = vrot.slane %v116, %v124
    %128 = vmatprep.subr.mxu0 %v85
    %129 = vmatpush1.msra.mxu0 %v84
    %130 = vmatprep.subr.mxu0 %v87
    %131 = vmatpush1.msra.mxu0 %v86
    %132 = vmatprep.subr.mxu0 %v89
    %133 = vmatpush1.msra.mxu0 %v88
    %134 = vmatprep.subr.mxu0 %v91
    %135 = vmatpush1.msra.mxu0 %v90
    %136 = vmatprep.subr.mxu0 %v93
    %137 = vmatpush1.msra.mxu0 %v92
    %138 = vmatprep.subr.mxu0 %v95
    %139 = vmatpush1.msra.mxu0 %v94
    %140 = vmatprep.subr.mxu0 %v97
    %141 = vmatpush1.msra.mxu0 %v96
    %142 = vmatprep.subr.mxu0 %v99
    %143 = vmatpush1.msra.mxu0 %v98
    %144 = vmatprep.subr.mxu0 %v101
    %145 = vmatpush1.msra.mxu0 %v100
    %146 = vmatprep.subr.mxu0 %v103
    %147 = vmatpush1.msra.mxu0 %v102
    %148 = vmatprep.subr.mxu0 %v105
    %149 = vmatpush1.msra.mxu0 %v104
    %150 = vmatprep.subr.mxu0 %v107
    %151 = vmatpush1.msra.mxu0 %v106
    %152 = vmatprep.subr.mxu0 %v109
    %153 = vmatpush1.msra.mxu0 %v108
    %154 = vmatprep.subr.mxu0 %v111
    %155 = vmatpush1.msra.mxu0 %v110
    %156 = vmatprep.subr.mxu0 %v113
    %157 = vmatpush1.msra.mxu0 %v112
    %158 = vmatprep.subr.mxu0 %v115
    %159 = vmatpush1.msra.mxu0 %v114
    %160 = vmatprep.subr.mxu0 0.0
    %161 = vmatpush1.msra.mxu0 0.0
    %162 = vmatprep.subr.mxu0 0.0
    %163 = vmatpush1.msra.mxu0 0.0
    %164 = vmatprep.subr.mxu0 0.0
    %165 = vmatpush1.msra.mxu0 0.0
    %166 = vmatprep.subr.mxu0 0.0
    %167 = vmatpush1.msra.mxu0 0.0
    %168 = vmatprep.subr.mxu0 0.0
    %169 = vmatpush1.msra.mxu0 0.0
    %170 = vmatprep.subr.mxu0 0.0
    %171 = vmatpush1.msra.mxu0 0.0
    %172 = vmatprep.subr.mxu0 0.0
    %173 = vmatpush1.msra.mxu0 0.0
    %174 = vmatprep.subr.mxu0 0.0
    %175 = vmatpush1.msra.mxu0 0.0
    %176 = vmatprep.subr.mxu0 0.0
    %177 = vmatpush1.msra.mxu0 0.0
    %178 = vmatprep.subr.mxu0 0.0
    %179 = vmatpush1.msra.mxu0 0.0
    %180 = vmatprep.subr.mxu0 0.0
    %181 = vmatpush1.msra.mxu0 0.0
    %182 = vmatprep.subr.mxu0 0.0
    %183 = vmatpush1.msra.mxu0 0.0
    %184 = vmatprep.subr.mxu0 0.0
    %185 = vmatpush1.msra.mxu0 0.0
    %186 = vmatprep.subr.mxu0 0.0
    %187 = vmatpush1.msra.mxu0 0.0
    %188 = vmatprep.subr.mxu0 0.0
    %189 = vmatpush1.msra.mxu0 0.0
    %190 = vmatprep.subr.mxu0 0.0
    %191 = vmatpush1.msra.mxu0 0.0
    %192 = vmatprep.mubr.f32.mxu0 0.0
    %193 = vmatmul.mubr.f32.gmra.mrb[0].mxu0 %v83
    %v194 = vpop.f32.mrb[0].mxu0
    %v195 = vadd.f32 %v121, %v194
    %v196 = vpop.f32.mrb[0].mxu0
    %v197 = vadd.f32 %v125, %v196
    %198 = vdwg.mxu0
    %v199 = vmax.f32 %v195, 0.0
    %v200 = vmax.f32 %v197, 0.0
    %v201 = vld [vmem:[#allocation7] sm:$0xff]
    %v202 = vld [vmem:[#allocation7 + $0x8] sm:$0xff]
    %v203 = vld [vmem:[#allocation7 + $0x10] sm:$0xff]
    %v204 = vld [vmem:[#allocation7 + $0x18] sm:$0xff]
    %v205 = vld [vmem:[#allocation7 + $0x20] sm:$0xff]
    %v206 = vld [vmem:[#allocation7 + $0x28] sm:$0xff]
    %v207 = vld [vmem:[#allocation7 + $0x30] sm:$0xff]
    %v208 = vld [vmem:[#allocation7 + $0x38] sm:$0xff]
    %v209 = vld [vmem:[#allocation7 + $0x40] sm:$0xff]
    %v210 = vld [vmem:[#allocation7 + $0x48] sm:$0xff]
    %v211 = vld [vmem:[#allocation7 + $0x50] sm:$0xff]
    %v212 = vld [vmem:[#allocation7 + $0x58] sm:$0xff]
    %v213 = vld [vmem:[#allocation7 + $0x60] sm:$0xff]
    %v214 = vld [vmem:[#allocation7 + $0x68] sm:$0xff]
    %v215 = vld [vmem:[#allocation7 + $0x70] sm:$0xff]
    %v216 = vld [vmem:[#allocation7 + $0x78] sm:$0xff]
    %v217 = vld [vmem:[#allocation7 + $0x80] sm:$0xff]
    %v218 = vld [vmem:[#allocation7 + $0x88] sm:$0xff]
    %v219 = vld [vmem:[#allocation7 + $0x90] sm:$0xff]
    %v220 = vld [vmem:[#allocation7 + $0x98] sm:$0xff]
    %v221 = vld [vmem:[#allocation7 + $0xa0] sm:$0xff]
    %v222 = vld [vmem:[#allocation7 + $0xa8] sm:$0xff]
    %v223 = vld [vmem:[#allocation7 + $0xb0] sm:$0xff]
    %v224 = vld [vmem:[#allocation7 + $0xb8] sm:$0xff]
    %v225 = vld [vmem:[#allocation7 + $0xc0] sm:$0xff]
    %v226 = vld [vmem:[#allocation7 + $0xc8] sm:$0xff]
    %v227 = vld [vmem:[#allocation7 + $0xd0] sm:$0xff]
    %v228 = vld [vmem:[#allocation7 + $0xd8] sm:$0xff]
    %v229 = vld [vmem:[#allocation7 + $0xe0] sm:$0xff]
    %v230 = vld [vmem:[#allocation7 + $0xe8] sm:$0xff]
    %v231 = vld [vmem:[#allocation7 + $0xf0] sm:$0xff]
    %v232 = vld [vmem:[#allocation7 + $0xf8] sm:$0xff]
    %v233 = vld [vmem:[%s4] sm:$0x1]
    %v235 = vlaneseq
    %v236 = vshrl.u32 %v235, 7
    %v237 = vsub.s32 0, %v236
    %v238 = vrot.slane %v233, %v237
    %240 = vmatprep.subr.mxu0 0.0
    %241 = vmatpush1.msra.mxu0 %v201
    %242 = vmatprep.subr.mxu0 0.0
    %243 = vmatpush1.msra.mxu0 %v202
    %244 = vmatprep.subr.mxu0 0.0
    %245 = vmatpush1.msra.mxu0 %v203
    %246 = vmatprep.subr.mxu0 0.0
    %247 = vmatpush1.msra.mxu0 %v204
    %248 = vmatprep.subr.mxu0 0.0
    %249 = vmatpush1.msra.mxu0 %v205
    %250 = vmatprep.subr.mxu0 0.0
    %251 = vmatpush1.msra.mxu0 %v206
    %252 = vmatprep.subr.mxu0 0.0
    %253 = vmatpush1.msra.mxu0 %v207
    %254 = vmatprep.subr.mxu0 0.0
    %255 = vmatpush1.msra.mxu0 %v208
    %256 = vmatprep.subr.mxu0 0.0
    %257 = vmatpush1.msra.mxu0 %v209
    %258 = vmatprep.subr.mxu0 0.0
    %259 = vmatpush1.msra.mxu0 %v210
    %260 = vmatprep.subr.mxu0 0.0
    %261 = vmatpush1.msra.mxu0 %v211
    %262 = vmatprep.subr.mxu0 0.0
    %263 = vmatpush1.msra.mxu0 %v212
    %264 = vmatprep.subr.mxu0 0.0
    %265 = vmatpush1.msra.mxu0 %v213
    %266 = vmatprep.subr.mxu0 0.0
    %267 = vmatpush1.msra.mxu0 %v214
    %268 = vmatprep.subr.mxu0 0.0
    %269 = vmatpush1.msra.mxu0 %v215
    %270 = vmatprep.subr.mxu0 0.0
    %271 = vmatpush1.msra.mxu0 %v216
    %272 = vmatprep.subr.mxu0 0.0
    %273 = vmatpush1.msra.mxu0 %v217
    %274 = vmatprep.subr.mxu0 0.0
    %275 = vmatpush1.msra.mxu0 %v218
    %276 = vmatprep.subr.mxu0 0.0
    %277 = vmatpush1.msra.mxu0 %v219
    %278 = vmatprep.subr.mxu0 0.0
    %279 = vmatpush1.msra.mxu0 %v220
    %280 = vmatprep.subr.mxu0 0.0
    %281 = vmatpush1.msra.mxu0 %v221
    %282 = vmatprep.subr.mxu0 0.0
    %283 = vmatpush1.msra.mxu0 %v222
    %284 = vmatprep.subr.mxu0 0.0
    %285 = vmatpush1.msra.mxu0 %v223
    %286 = vmatprep.subr.mxu0 0.0
    %287 = vmatpush1.msra.mxu0 %v224
    %288 = vmatprep.subr.mxu0 0.0
    %289 = vmatpush1.msra.mxu0 %v225
    %290 = vmatprep.subr.mxu0 0.0
    %291 = vmatpush1.msra.mxu0 %v226
    %292 = vmatprep.subr.mxu0 0.0
    %293 = vmatpush1.msra.mxu0 %v227
    %294 = vmatprep.subr.mxu0 0.0
    %295 = vmatpush1.msra.mxu0 %v228
    %296 = vmatprep.subr.mxu0 0.0
    %297 = vmatpush1.msra.mxu0 %v229
    %298 = vmatprep.subr.mxu0 0.0
    %299 = vmatpush1.msra.mxu0 %v230
    %300 = vmatprep.subr.mxu0 0.0
    %301 = vmatpush1.msra.mxu0 %v231
    %302 = vmatprep.subr.mxu0 0.0
    %303 = vmatpush1.msra.mxu0 %v232
    %304 = vmatprep.mubr.f32.mxu0 %v200
    %305 = vmatmul.mubr.f32.gmra.mrb[0].mxu0 %v199
    %v306 = vpop.f32.mrb[0].mxu0
    %v307 = vadd.f32 %v238, %v306
    %v308 = vpop.f32.mrb[0].mxu0
    %309 = vdwg.mxu0
    %v310 = vadd.f32 %v307, %v83
    %v311 = vld [vmem:[#allocation8] sm:$0xff]
    %v312 = vld [vmem:[#allocation8 + $0x8] sm:$0xff]
    %v313 = vld [vmem:[#allocation8 + $0x10] sm:$0xff]
    %v314 = vld [vmem:[#allocation8 + $0x18] sm:$0xff]
    %v315 = vld [vmem:[#allocation8 + $0x20] sm:$0xff]
    %v316 = vld [vmem:[#allocation8 + $0x28] sm:$0xff]
    %v317 = vld [vmem:[#allocation8 + $0x30] sm:$0xff]
    %v318 = vld [vmem:[#allocation8 + $0x38] sm:$0xff]
    %v319 = vld [vmem:[#allocation8 + $0x40] sm:$0xff]
    %v320 = vld [vmem:[#allocation8 + $0x48] sm:$0xff]
    %v321 = vld [vmem:[#allocation8 + $0x50] sm:$0xff]
    %v322 = vld [vmem:[#allocation8 + $0x58] sm:$0xff]
    %v323 = vld [vmem:[#allocation8 + $0x60] sm:$0xff]
    %v324 = vld [vmem:[#allocation8 + $0x68] sm:$0xff]
    %v325 = vld [vmem:[#allocation8 + $0x70] sm:$0xff]
    %v326 = vld [vmem:[#allocation8 + $0x78] sm:$0xff]
    %327 = vmatprep.subr.mxu0 0.0
    %328 = vmatpush1.msra.mxu0 %v311
    %329 = vmatprep.subr.mxu0 0.0
    %330 = vmatpush1.msra.mxu0 %v312
    %331 = vmatprep.subr.mxu0 0.0
    %332 = vmatpush1.msra.mxu0 %v313
    %333 = vmatprep.subr.mxu0 0.0
    %334 = vmatpush1.msra.mxu0 %v314
    %335 = vmatprep.subr.mxu0 0.0
    %336 = vmatpush1.msra.mxu0 %v315
    %337 = vmatprep.subr.mxu0 0.0
    %338 = vmatpush1.msra.mxu0 %v316
    %339 = vmatprep.subr.mxu0 0.0
    %340 = vmatpush1.msra.mxu0 %v317
    %341 = vmatprep.subr.mxu0 0.0
    %342 = vmatpush1.msra.mxu0 %v318
    %343 = vmatprep.subr.mxu0 0.0
    %344 = vmatpush1.msra.mxu0 %v319
    %345 = vmatprep.subr.mxu0 0.0
    %346 = vmatpush1.msra.mxu0 %v320
    %347 = vmatprep.subr.mxu0 0.0
    %348 = vmatpush1.msra.mxu0 %v321
    %349 = vmatprep.subr.mxu0 0.0
    %350 = vmatpush1.msra.mxu0 %v322
    %351 = vmatprep.subr.mxu0 0.0
    %352 = vmatpush1.msra.mxu0 %v323
    %353 = vmatprep.subr.mxu0 0.0
    %354 = vmatpush1.msra.mxu0 %v324
    %355 = vmatprep.subr.mxu0 0.0
    %356 = vmatpush1.msra.mxu0 %v325
    %357 = vmatprep.subr.mxu0 0.0
    %358 = vmatpush1.msra.mxu0 %v326
    %359 = vmatprep.subr.mxu0 0.0
    %360 = vmatpush1.msra.mxu0 0.0
    %361 = vmatprep.subr.mxu0 0.0
    %362 = vmatpush1.msra.mxu0 0.0
    %363 = vmatprep.subr.mxu0 0.0
    %364 = vmatpush1.msra.mxu0 0.0
    %365 = vmatprep.subr.mxu0 0.0
    %366 = vmatpush1.msra.mxu0 0.0
    %367 = vmatprep.subr.mxu0 0.0
    %368 = vmatpush1.msra.mxu0 0.0
    %369 = vmatprep.subr.mxu0 0.0
    %370 = vmatpush1.msra.mxu0 0.0
    %371 = vmatprep.subr.mxu0 0.0
    %372 = vmatpush1.msra.mxu0 0.0
    %373 = vmatprep.subr.mxu0 0.0
    %374 = vmatpush1.msra.mxu0 0.0
    %375 = vmatprep.subr.mxu0 0.0
    %376 = vmatpush1.msra.mxu0 0.0
    %377 = vmatprep.subr.mxu0 0.0
    %378 = vmatpush1.msra.mxu0 0.0
    %379 = vmatprep.subr.mxu0 0.0
    %380 = vmatpush1.msra.mxu0 0.0
    %381 = vmatprep.subr.mxu0 0.0
    %382 = vmatpush1.msra.mxu0 0.0
    %383 = vmatprep.subr.mxu0 0.0
    %384 = vmatpush1.msra.mxu0 0.0
    %385 = vmatprep.subr.mxu0 0.0
    %386 = vmatpush1.msra.mxu0 0.0
    %387 = vmatprep.subr.mxu0 0.0
    %388 = vmatpush1.msra.mxu0 0.0
    %389 = vmatprep.subr.mxu0 0.0
    %390 = vmatpush1.msra.mxu0 0.0
    %391 = vmatprep.mubr.f32.mxu0 0.0
    %392 = vmatmul.mubr.f32.gmra.mrb[0].mxu0 %v310
    %v393 = vpop.f32.mrb[0].mxu0
    %v394 = vadd.f32 0.0, %v393
    %v395 = vpop.f32.mrb[0].mxu0
    %396 = vdwg.mxu0
    %v397 = vsub.f32 %v310, %v394
    %v398 = vmul.f32 %v397, %v397
    %399 = vmatprep.subr.mxu0 0.0
    %400 = vmatpush1.msra.mxu0 %v311
    %401 = vmatprep.subr.mxu0 0.0
    %402 = vmatpush1.msra.mxu0 %v312
    %403 = vmatprep.subr.mxu0 0.0
    %404 = vmatpush1.msra.mxu0 %v313
    %405 = vmatprep.subr.mxu0 0.0
    %406 = vmatpush1.msra.mxu0 %v314
    %407 = vmatprep.subr.mxu0 0.0
    %408 = vmatpush1.msra.mxu0 %v315
    %409 = vmatprep.subr.mxu0 0.0
    %410 = vmatpush1.msra.mxu0 %v316
    %411 = vmatprep.subr.mxu0 0.0
    %412 = vmatpush1.msra.mxu0 %v317
    %413 = vmatprep.subr.mxu0 0.0
    %414 = vmatpush1.msra.mxu0 %v318
    %415 = vmatprep.subr.mxu0 0.0
    %416 = vmatpush1.msra.mxu0 %v319
    %417 = vmatprep.subr.mxu0 0.0
    %418 = vmatpush1.msra.mxu0 %v320
    %419 = vmatprep.subr.mxu0 0.0
    %420 = vmatpush1.msra.mxu0 %v321
    %421 = vmatprep.subr.mxu0 0.0
    %422 = vmatpush1.msra.mxu0 %v322
    %423 = vmatprep.subr.mxu0 0.0
    %424 = vmatpush1.msra.mxu0 %v323
    %425 = vmatprep.subr.mxu0 0.0
    %426 = vmatpush1.msra.mxu0 %v324
    %427 = vmatprep.subr.mxu0 0.0
    %428 = vmatpush1.msra.mxu0 %v325
    %429 = vmatprep.subr.mxu0 0.0
    %430 = vmatpush1.msra.mxu0 %v326
    %431 = vmatprep.subr.mxu0 0.0
    %432 = vmatpush1.msra.mxu0 0.0
    %433 = vmatprep.subr.mxu0 0.0
    %434 = vmatpush1.msra.mxu0 0.0
    %435 = vmatprep.subr.mxu0 0.0
    %436 = vmatpush1.msra.mxu0 0.0
    %437 = vmatprep.subr.mxu0 0.0
    %438 = vmatpush1.msra.mxu0 0.0
    %439 = vmatprep.subr.mxu0 0.0
    %440 = vmatpush1.msra.mxu0 0.0
    %441 = vmatprep.subr.mxu0 0.0
    %442 = vmatpush1.msra.mxu0 0.0
    %443 = vmatprep.subr.mxu0 0.0
    %444 = vmatpush1.msra.mxu0 0.0
    %445 = vmatprep.subr.mxu0 0.0
    %446 = vmatpush1.msra.mxu0 0.0
    %447 = vmatprep.subr.mxu0 0.0
    %448 = vmatpush1.msra.mxu0 0.0
    %449 = vmatprep.subr.mxu0 0.0
    %450 = vmatpush1.msra.mxu0 0.0
    %451 = vmatprep.subr.mxu0 0.0
    %452 = vmatpush1.msra.mxu0 0.0
    %453 = vmatprep.subr.mxu0 0.0
    %454 = vmatpush1.msra.mxu0 0.0
    %455 = vmatprep.subr.mxu0 0.0
    %456 = vmatpush1.msra.mxu0 0.0
    %457 = vmatprep.subr.mxu0 0.0
    %458 = vmatpush1.msra.mxu0 0.0
    %459 = vmatprep.subr.mxu0 0.0
    %460 = vmatpush1.msra.mxu0 0.0
    %461 = vmatprep.subr.mxu0 0.0
    %462 = vmatpush1.msra.mxu0 0.0
    %463 = vmatprep.mubr.f32.mxu0 0.0
    %464 = vmatmul.mubr.f32.gmra.mrb[0].mxu0 %v398
    %v465 = vpop.f32.mrb[0].mxu0
    %v466 = vadd.f32 1e-06, %v465
    %v467 = vpop.f32.mrb[0].mxu0
    %468 = vdwg.mxu0
    %v469 = vrsqrt.pop %v466
    %v470 = vmul.f32 %v397, %v469
    %v471 = vld [vmem:[%s5] sm:$0x1]
    %v473 = vlaneseq
    %v474 = vshrl.u32 %v473, 7
    %v475 = vsub.s32 0, %v474
    %v476 = vrot.slane %v471, %v475
    %v478 = vmul.f32 %v470, %v476
    %v479 = vld [vmem:[%s6] sm:$0x1]
    %v481 = vlaneseq
    %v482 = vshrl.u32 %v481, 7
    %v483 = vsub.s32 0, %v482
    %v484 = vrot.slane %v479, %v483
    %v486 = vadd.f32 %v478, %v484
    %487 = vst [vmem:[#allocation10] sm:$0xf] %v486
    // Predicated region
    $region50: #{tpu_custom_call.1} parent=1 // pred_check
      _
    $region51: #{tpu_custom_call.1} parent=1 // pred_check_branch
      %489 = sbr.rel (0) target = $region53
    $region52: #{tpu_custom_call.1} parent=1 // pred_region
      %s491 = ssub.s32 64, 64
      %492 = vsyncadd [#allocation4], %s491
      %s494 = sshll.u32 [#allocation10], 4
      %s495 = int_to_ptr.vmem [resolvable:$true] %s494
      %497 = dma.vmem_to_hbm [thread:$0]  %s495, 64, %s8, [#allocation4]
    $region53: #{tpu_custom_call.1} parent=1 // pred_fallthru
      _
    // Predicated region
    $region54: #{tpu_custom_call.1} parent=1 // pred_check
      _
    $region55: #{tpu_custom_call.1} parent=1 // pred_check_branch
      %499 = sbr.rel (0) target = $region57
    $region56: #{tpu_custom_call.1} parent=1 // pred_region
      %500 = dma.done [#allocation4], 64
    $region57: #{tpu_custom_call.1} parent=1 // pred_fallthru
      _
    %501 = vsyncpa [#allocation3], 1
    %502 = vsyncpa [#allocation6], 1
    %503 = vsyncpa [#allocation9], 1
    %504 = vsyncpa [#allocation4], 1

</llo_original>
